<compile_context>
chip_gen: v7x
topology: tpu7x:2x2x1
jax: 0.10.0
libtpu: 0.0.40
codegen_flags: <defaults>
</compile_context>

<pallas_src>
import functools
import math

import jax
import jax.numpy as jnp
from jax.experimental import pallas as pl
from jax.experimental.pallas import tpu as pltpu

_MASK_VALUE = -1e30          # finite stand-in for -inf (same softmax result, no NaNs)
_VMEM_LIMIT = 40 * 1024 * 1024  # headroom even on v7x's 64 MiB VMEM


def _round_up(x, m):
    return (x + m - 1) // m * m


# ----------------------------------------------------------------------------
# 1. Tiled batched matmul:  out[g] = a[g] @ b[g]
# ----------------------------------------------------------------------------
def _bmm_kernel(a_ref, b_ref, o_ref, acc_ref):
    @pl.when(pl.program_id(3) == 0)
    def _():
        acc_ref[...] = jnp.zeros_like(acc_ref)

    acc_ref[...] += jnp.dot(a_ref[0], b_ref[0], preferred_element_type=jnp.float32)

    @pl.when(pl.program_id(3) == pl.num_programs(3) - 1)
    def _():
        o_ref[0] = acc_ref[...].astype(o_ref.dtype)


def pallas_bmm(a, b, out_dtype=jnp.bfloat16, tm_max=256, tn_max=256, tk_max=512):
    """a: [G, M, K], b: [G, K, N] -> [G, M, N] (f32 MXU accumulation, cast to out_dtype)."""
    G, M, K = a.shape
    Gb, Kb, N = b.shape
    assert G == Gb and K == Kb
    tm = min(tm_max, _round_up(M, 8))
    tn = min(tn_max, _round_up(N, 128))
    tk = min(tk_max, _round_up(K, 128))
    Mp, Kp, Np = _round_up(M, tm), _round_up(K, tk), _round_up(N, tn)
    if (Mp, Kp) != (M, K):
        a = jnp.pad(a, ((0, 0), (0, Mp - M), (0, Kp - K)))
    if (Kp, Np) != (K, N):
        b = jnp.pad(b, ((0, 0), (0, Kp - K), (0, Np - N)))

    grid = (G, Mp // tm, Np // tn, Kp // tk)
    cost = pl.CostEstimate(
        flops=int(2 * G * Mp * Np * Kp),
        transcendentals=0,
        bytes_accessed=int(a.size * a.dtype.itemsize + b.size * b.dtype.itemsize
                           + G * Mp * Np * jnp.dtype(out_dtype).itemsize),
    )
    out = pl.pallas_call(
        _bmm_kernel,
        out_shape=jax.ShapeDtypeStruct((G, Mp, Np), out_dtype),
        grid=grid,
        in_specs=[
            pl.BlockSpec((1, tm, tk), lambda g, i, j, k: (g, i, k)),
            pl.BlockSpec((1, tk, tn), lambda g, i, j, k: (g, k, j)),
        ],
        out_specs=pl.BlockSpec((1, tm, tn), lambda g, i, j, k: (g, i, j)),
        scratch_shapes=[pltpu.VMEM((tm, tn), jnp.float32)],
        compiler_params=pltpu.CompilerParams(
            dimension_semantics=("parallel", "parallel", "parallel", "arbitrary"),
            vmem_limit_bytes=_VMEM_LIMIT,
        ),
        cost_estimate=cost,
    )(a, b)
    if (Mp, Np) != (M, N):
        out = out[:, :M, :N]
    return out


# ----------------------------------------------------------------------------
# 2. RMSNorm (kv_norm)
# ----------------------------------------------------------------------------
def _rmsnorm_kernel(x_ref, w_ref, o_ref, *, eps):
    x = x_ref[...].astype(jnp.float32)
    ms = jnp.mean(x * x, axis=-1, keepdims=True)
    y = x * jax.lax.rsqrt(ms + eps)
    o_ref[...] = (y * w_ref[...].astype(jnp.float32)).astype(o_ref.dtype)


def pallas_rmsnorm(x, w, eps=1e-6, tm_max=256):
    """x: [T, C] bf16, w: [C] -> [T, C] bf16."""
    T, C = x.shape
    tm = min(tm_max, _round_up(T, 8))
    Tp = _round_up(T, tm)
    xp = jnp.pad(x, ((0, Tp - T), (0, 0))) if Tp != T else x
    out = pl.pallas_call(
        functools.partial(_rmsnorm_kernel, eps=eps),
        out_shape=jax.ShapeDtypeStruct((Tp, C), x.dtype),
        grid=(Tp // tm,),
        in_specs=[
            pl.BlockSpec((tm, C), lambda i: (i, 0)),
            pl.BlockSpec((1, C), lambda i: (0, 0)),
        ],
        out_specs=pl.BlockSpec((tm, C), lambda i: (i, 0)),
        compiler_params=pltpu.CompilerParams(
            dimension_semantics=("parallel",),
            vmem_limit_bytes=_VMEM_LIMIT,
        ),
    )(xp, w.reshape(1, C))
    return out[:T] if Tp != T else out


# ----------------------------------------------------------------------------
# 3. Absorbed MLA attention core (flash-style online softmax over the kv axis)
# ----------------------------------------------------------------------------
def _mla_attn_kernel(qn_ref, qp_ref, kv_ref, pe_ref, mask_ref, o_ref,
                     m_sc, l_sc, acc_sc, *, scale):
    kb = pl.program_id(2)

    @pl.when(kb == 0)
    def _():
        m_sc[...] = jnp.full_like(m_sc, -jnp.inf)
        l_sc[...] = jnp.zeros_like(l_sc)
        acc_sc[...] = jnp.zeros_like(acc_sc)

    qn = qn_ref[0, 0]     # [S, C]  bf16
    qp = qp_ref[0, 0]     # [S, R]  bf16
    kv = kv_ref[0]        # [TKV, C]
    pe = pe_ref[0]        # [TKV, R]

    # scores = q_nope_abs . kv^T + q_pe . pe^T   (f32 on the MXU)
    s = jax.lax.dot_general(qn, kv, (((1,), (1,)), ((), ())),
                            preferred_element_type=jnp.float32)
    s = s + jax.lax.dot_general(qp, pe, (((1,), (1,)), ((), ())),
                                preferred_element_type=jnp.float32)
    s = s * scale + mask_ref[...]

    m_prev = m_sc[...]
    m_new = jnp.maximum(m_prev, jnp.max(s, axis=-1, keepdims=True))
    alpha = jnp.exp(m_prev - m_new)
    p = jnp.exp(s - m_new)
    l_sc[...] = alpha * l_sc[...] + jnp.sum(p, axis=-1, keepdims=True)
    acc_sc[...] = alpha * acc_sc[...] + jnp.dot(
        p.astype(kv.dtype), kv, preferred_element_type=jnp.float32)
    m_sc[...] = m_new

    @pl.when(kb == pl.num_programs(2) - 1)
    def _():
        o_ref[0, 0] = (acc_sc[...] *
                       pl.reciprocal(l_sc[...], approx=True)).astype(o_ref.dtype)


def pallas_mla_attention(q_abs, q_pe, kv, pe, mask, scale, tkv_max=512):
    """q_abs: [B,H,S,C], q_pe: [B,H,S,R], kv: [B,T,C], pe: [B,T,R], mask: [S,T] or None."""
    B, H, S, C = q_abs.shape
    R = q_pe.shape[-1]
    T = kv.shape[1]

    if T <= tkv_max:
        Tp = _round_up(T, 8)
        tkv = Tp                       # single kv block (mask block == full last dim)
    else:
        tkv = tkv_max                  # multiple of 128 -> lane-dense mask/kv blocks
        Tp = _round_up(T, tkv)

    if Tp != T:
        kv = jnp.pad(kv, ((0, 0), (0, Tp - T), (0, 0)))
        pe = jnp.pad(pe, ((0, 0), (0, Tp - T), (0, 0)))
    mask_arr = (jnp.zeros((S, T), jnp.float32) if mask is None
                else mask.astype(jnp.float32))
    if Tp != T:
        mask_arr = jnp.pad(mask_arr, ((0, 0), (0, Tp - T)),
                           constant_values=_MASK_VALUE)

    cost = pl.CostEstimate(
        flops=int(2 * B * H * S * Tp * (C + R) + 2 * B * H * S * Tp * C),
        transcendentals=int(B * H * S * Tp),
        bytes_accessed=int(q_abs.size * 2 + q_pe.size * 2 + kv.size * 2
                           + pe.size * 2 + B * H * S * C * 2),
    )
    out = pl.pallas_call(
        functools.partial(_mla_attn_kernel, scale=float(scale)),
        out_shape=jax.ShapeDtypeStruct((B, H, S, C), q_abs.dtype),
        grid=(B, H, Tp // tkv),
        in_specs=[
            pl.BlockSpec((1, 1, S, C), lambda b, h, k: (b, h, 0, 0)),
            pl.BlockSpec((1, 1, S, R), lambda b, h, k: (b, h, 0, 0)),
            pl.BlockSpec((1, tkv, C), lambda b, h, k: (b, k, 0)),
            pl.BlockSpec((1, tkv, R), lambda b, h, k: (b, k, 0)),
            pl.BlockSpec((S, tkv), lambda b, h, k: (0, k)),
        ],
        out_specs=pl.BlockSpec((1, 1, S, C), lambda b, h, k: (b, h, 0, 0)),
        scratch_shapes=[
            pltpu.VMEM((S, 1), jnp.float32),   # running max
            pltpu.VMEM((S, 1), jnp.float32),   # running denom
            pltpu.VMEM((S, C), jnp.float32),   # output accumulator
        ],
        compiler_params=pltpu.CompilerParams(
            dimension_semantics=("parallel", "parallel", "arbitrary"),
            vmem_limit_bytes=_VMEM_LIMIT,
        ),
        cost_estimate=cost,
    )(q_abs, q_pe, kv, pe, mask_arr)
    return out


# ----------------------------------------------------------------------------
# RoPE (apply_rotary_emb): interleaved complex rotation — wrapper-side glue.
# ----------------------------------------------------------------------------
def apply_rope(x, cos, sin):
    """x: [..., S, H, R]; cos/sin: [S, R//2]."""
    xf = x.astype(jnp.float32)
    xs = xf.reshape(*x.shape[:-1], -1, 2)
    xr, xi = xs[..., 0], xs[..., 1]
    c = cos[None, :, None, :]
    s = sin[None, :, None, :]
    yr = xr * c - xi * s
    yi = xr * s + xi * c
    y = jnp.stack([yr, yi], axis=-1).reshape(x.shape)
    return y.astype(x.dtype)


def precompute_rope(positions, rope_dim, theta=10000.0):
    inv = 1.0 / (theta ** (jnp.arange(0, rope_dim, 2, dtype=jnp.float32) / rope_dim))
    ang = positions.astype(jnp.float32)[:, None] * inv[None, :]
    return jnp.cos(ang), jnp.sin(ang)


# ----------------------------------------------------------------------------
# MLA forward (absorb path), built from the Pallas kernels above.
# ----------------------------------------------------------------------------
def mla_forward(params, x, start_pos, cos, sin, mask, kv_cache, pe_cache, cfg):
    B, S, dim = x.shape
    end = start_pos + S
    H, Dn, R, Dv, C = (cfg["n_heads"], cfg["qk_nope_head_dim"], cfg["qk_rope_head_dim"],
                       cfg["v_head_dim"], cfg["kv_lora_rank"])
    scale = cfg["softmax_scale"]
    x2 = x.reshape(B * S, dim)

    # q = wq(x)  -> [B, S, H, Dn + R]
    q = pallas_bmm(x2[None], params["wq_t"][None])[0].reshape(B, S, H, Dn + R)
    q_nope, q_pe = q[..., :Dn], q[..., Dn:]
    q_pe = apply_rope(q_pe, cos, sin)

    # kv = wkv_a(x) -> latent kv [B,S,C] and rotary key k_pe [B,S,R]
    kvr = pallas_bmm(x2[None], params["wkv_a_t"][None])[0].reshape(B, S, C + R)
    kv_lat, k_pe = kvr[..., :C], kvr[..., C:]
    k_pe = apply_rope(k_pe[:, :, None, :], cos, sin)[:, :, 0, :]

    # absorb q_nope into the latent space: einsum('bshd,hdc->bshc') as per-head matmul
    qn_h = q_nope.transpose(2, 0, 1, 3).reshape(H, B * S, Dn)
    q_abs = pallas_bmm(qn_h, params["wkv_b_qk"])                 # [H, B*S, C]
    q_abs = q_abs.reshape(H, B, S, C).transpose(1, 0, 2, 3)      # [B, H, S, C]
    q_pe_h = q_pe.transpose(0, 2, 1, 3)                          # [B, H, S, R]

    # kv_norm + cache update (functional emulation of the torch buffers)
    kv_n = pallas_rmsnorm(kv_lat.reshape(B * S, C), params["kv_norm_w"]).reshape(B, S, C)
    kv_cache = jax.lax.dynamic_update_slice(kv_cache, kv_n.astype(kv_cache.dtype),
                                            (0, start_pos, 0))
    pe_cache = jax.lax.dynamic_update_slice(pe_cache, k_pe.astype(pe_cache.dtype),
                                            (0, start_pos, 0))

    # attention over cached context [:end]
    attn = pallas_mla_attention(q_abs, q_pe_h, kv_cache[:, :end], pe_cache[:, :end],
                                mask, scale)                     # [B, H, S, C]

    # value up-projection: einsum('bshc,hdc->bshd') as per-head matmul with pre-transposed wkv_b_v
    attn_h = attn.transpose(1, 0, 2, 3).reshape(H, B * S, C)
    o = pallas_bmm(attn_h, params["wkv_b_v_t"])                  # [H, B*S, Dv]
    o = o.reshape(H, B, S, Dv).transpose(1, 2, 0, 3).reshape(B * S, H * Dv)

    # output projection
    out = pallas_bmm(o[None], params["wo_t"][None])[0].reshape(B, S, dim)
    return out, kv_cache, pe_cache


# ----------------------------------------------------------------------------
# Pure-JAX reference of the torch MLA forward (absorb path).
# ----------------------------------------------------------------------------
def _lin(x, w):
    return (x.astype(jnp.float32) @ w.astype(jnp.float32).T).astype(jnp.bfloat16)


def ref_mla(weights, x, start_pos, cos, sin, mask, kv_cache, pe_cache, cfg, eps=1e-6):
    B, S, dim = x.shape
    end = start_pos + S
    H, Dn, R, Dv, C = (cfg["n_heads"], cfg["qk_nope_head_dim"], cfg["qk_rope_head_dim"],
                       cfg["v_head_dim"], cfg["kv_lora_rank"])
    scale = cfg["softmax_scale"]

    q = _lin(x, weights["wq"]).reshape(B, S, H, Dn + R)
    q_nope, q_pe = q[..., :Dn], q[..., Dn:]
    q_pe = apply_rope(q_pe, cos, sin)

    kvr = _lin(x, weights["wkv_a"])
    kv_lat, k_pe = kvr[..., :C], kvr[..., C:]
    k_pe = apply_rope(k_pe[:, :, None, :], cos, sin)[:, :, 0, :]

    wkv_b = weights["wkv_b"].astype(jnp.float32).reshape(H, Dn + Dv, C)
    q_abs = jnp.einsum("bshd,hdc->bshc", q_nope.astype(jnp.float32),
                       wkv_b[:, :Dn]).astype(jnp.bfloat16)

    kvf = kv_lat.astype(jnp.float32)
    kv_n = (kvf * jax.lax.rsqrt(jnp.mean(kvf * kvf, -1, keepdims=True) + eps)
            * weights["kv_norm_w"].astype(jnp.float32)).astype(jnp.bfloat16)
    kv_cache = jax.lax.dynamic_update_slice(kv_cache, kv_n.astype(kv_cache.dtype),
                                            (0, start_pos, 0))
    pe_cache = jax.lax.dynamic_update_slice(pe_cache, k_pe.astype(pe_cache.dtype),
                                            (0, start_pos, 0))

    kv_ctx = kv_cache[:, :end].astype(jnp.float32)
    pe_ctx = pe_cache[:, :end].astype(jnp.float32)
    scores = (jnp.einsum("bshc,btc->bsht", q_abs.astype(jnp.float32), kv_ctx)
              + jnp.einsum("bshr,btr->bsht", q_pe.astype(jnp.float32), pe_ctx)) * scale
    if mask is not None:
        scores = scores + mask.astype(jnp.float32)[None, :, None, :]
    probs = jax.nn.softmax(scores, axis=-1)
    o = jnp.einsum("bsht,btc->bshc", probs, kv_ctx)
    o = jnp.einsum("bshc,hdc->bshd", o, wkv_b[:, Dn:])
    out = _lin(o.reshape(B, S, H * Dv).astype(jnp.bfloat16), weights["wo"])
    return out


# ----------------------------------------------------------------------------
if __name__ == "__main__":
    # Small MLA config consistent with the module (scaled-down dims, TPU-friendly head dims).
    cfg = dict(
        dim=256, n_heads=4, qk_nope_head_dim=128, qk_rope_head_dim=64,
        v_head_dim=128, kv_lora_rank=256, max_seq_len=64, rope_theta=10000.0,
    )
    cfg["qk_head_dim"] = cfg["qk_nope_head_dim"] + cfg["qk_rope_head_dim"]
    cfg["softmax_scale"] = cfg["qk_head_dim"] ** (-0.5)   # max_seq_len <= original_seq_len

    batch, seqlen, start_pos = 2, 16, 0
    H, Dn, R, Dv, C, dim = (cfg["n_heads"], cfg["qk_nope_head_dim"], cfg["qk_rope_head_dim"],
                            cfg["v_head_dim"], cfg["kv_lora_rank"], cfg["dim"])

    key = jax.random.PRNGKey(0)
    ks = jax.random.split(key, 6)

    def winit(k, shape, fan_in):
        return (jax.random.normal(k, shape, jnp.float32) / math.sqrt(fan_in)).astype(jnp.bfloat16)

    x = jax.random.normal(ks[0], (batch, seqlen, dim), jnp.float32).astype(jnp.bfloat16)
    # torch-layout weights: [out_features, in_features]
    weights = dict(
        wq=winit(ks[1], (H * cfg["qk_head_dim"], dim), dim),
        wkv_a=winit(ks[2], (C + R, dim), dim),
        wkv_b=winit(ks[3], (H * (Dn + Dv), C), C),
        wo=winit(ks[4], (dim, H * Dv), H * Dv),
        kv_norm_w=(1.0 + 0.05 * jax.random.normal(ks[5], (C,), jnp.float32)),
    )

    # Pre-transpose / reshape weights ONCE at load time (no per-call w.T).
    wkv_b_r = weights["wkv_b"].reshape(H, Dn + Dv, C)
    params = dict(
        wq_t=weights["wq"].T,                                   # [dim, H*qk_head_dim]
        wkv_a_t=weights["wkv_a"].T,                             # [dim, C+R]
        wkv_b_qk=wkv_b_r[:, :Dn, :],                            # [H, Dn, C]
        wkv_b_v_t=jnp.transpose(wkv_b_r[:, Dn:, :], (0, 2, 1)), # [H, C, Dv]
        wo_t=weights["wo"].T,                                   # [H*Dv, dim]
        kv_norm_w=weights["kv_norm_w"],
    )

    # RoPE tables, caches, causal mask (prefill: seqlen > 1, start_pos = 0).
    positions = jnp.arange(start_pos, start_pos + seqlen)
    cos, sin = precompute_rope(positions, R, cfg["rope_theta"])
    kv_cache = jnp.zeros((batch, cfg["max_seq_len"], C), jnp.bfloat16)
    pe_cache = jnp.zeros((batch, cfg["max_seq_len"], R), jnp.bfloat16)
    end_pos = start_pos + seqlen
    mask = jnp.triu(jnp.full((seqlen, end_pos), _MASK_VALUE, jnp.float32), k=1)

    out, kv_cache_new, pe_cache_new = mla_forward(
        params, x, start_pos, cos, sin, mask, kv_cache, pe_cache, cfg)
    jax.block_until_ready(out)

    ref = ref_mla(weights, x, start_pos, cos, sin, mask, kv_cache, pe_cache, cfg)
    assert jnp.allclose(out.astype(jnp.float32), ref.astype(jnp.float32),
                        atol=5e-2, rtol=5e-2), "mismatch vs reference"

    print("KERNEL_OK")
</pallas_src>

<mosaic_0001>
module attributes {stable_mosaic.version = 11 : i64} {
  func.func @_bmm_kernel(%arg0: i32, %arg1: i32, %arg2: i32, %arg3: i32, %arg4: memref<1x32x256xbf16, #tpu.memory_space<vmem>>, %arg5: memref<1x256x256xbf16, #tpu.memory_space<vmem>>, %arg6: memref<1x32x256xbf16, #tpu.memory_space<vmem>>, %arg7: memref<32x256xf32, #tpu.memory_space<vmem>>) attributes {dimension_semantics = [#tpu.dimension_semantics<parallel>, #tpu.dimension_semantics<parallel>, #tpu.dimension_semantics<parallel>, #tpu.dimension_semantics<arbitrary>], iteration_bounds = array<i64: 1, 1, 3, 1>, scalar_prefetch = 0 : i64, scratch_operands = 1 : i64, tpu.core_type = #tpu.core_type<tc>, window_params = [{transform_indices = @transform_0, window_bounds = array<i64: 1, 32, 256>}, {transform_indices = @transform_1, window_bounds = array<i64: 1, 256, 256>}, {transform_indices = @transform_2, window_bounds = array<i64: 1, 32, 256>}]} {
    %c0_i32 = arith.constant 0 : i32
    %0 = arith.cmpi eq, %arg3, %c0_i32 : i32
    %1 = arith.extui %0 : i1 to i32
    %c0_i32_0 = arith.constant 0 : i32
    %2 = arith.cmpi ne, %1, %c0_i32_0 : i32
    scf.if %2 {
      %cst_12 = arith.constant 0.000000e+00 : f32
      %14 = vector.broadcast %cst_12 : f32 to vector<32x256xf32>
      %c0_13 = arith.constant 0 : index
      %c0_14 = arith.constant 0 : index
      %15 = vector.load %arg7[%c0_13, %c0_14] : memref<32x256xf32, #tpu.memory_space<vmem>>, vector<32x256xf32>
      tpu.vector_store %arg7[%c0_13, %c0_14], %14 {strides = array<i32>} : memref<32x256xf32, #tpu.memory_space<vmem>>, vector<32x256xf32>,
    } else {
    }
    %c0 = arith.constant 0 : index
    %c0_1 = arith.constant 0 : index
    %3 = vector.load %arg7[%c0, %c0_1] : memref<32x256xf32, #tpu.memory_space<vmem>>, vector<32x256xf32>
    %c0_2 = arith.constant 0 : index
    %c0_3 = arith.constant 0 : index
    %c0_4 = arith.constant 0 : index
    %4 = vector.load %arg4[%c0_2, %c0_3, %c0_4] : memref<1x32x256xbf16, #tpu.memory_space<vmem>>, vector<1x32x256xbf16>
    %5 = vector.shape_cast %4 : vector<1x32x256xbf16> to vector<32x256xbf16>
    %c0_5 = arith.constant 0 : index
    %c0_6 = arith.constant 0 : index
    %c0_7 = arith.constant 0 : index
    %6 = vector.load %arg5[%c0_5, %c0_6, %c0_7] : memref<1x256x256xbf16, #tpu.memory_space<vmem>>, vector<1x256x256xbf16>
    %7 = vector.shape_cast %6 : vector<1x256x256xbf16> to vector<256x256xbf16>
    %cst = arith.constant dense<0.000000e+00> : vector<32x256xf32>
    %8 = tpu.matmul %5, %7, %cst {dimension_numbers = #tpu.dot_dimension_numbers<[1], [0], [0], [1], [0, 0, 1, 1], [], []>} : vector<32x256xbf16>, vector<256x256xbf16>, vector<32x256xf32> -> vector<32x256xf32>
    %9 = arith.addf %3, %8 : vector<32x256xf32>
    %c0_8 = arith.constant 0 : index
    %c0_9 = arith.constant 0 : index
    %10 = vector.load %arg7[%c0_8, %c0_9] : memref<32x256xf32, #tpu.memory_space<vmem>>, vector<32x256xf32>
    tpu.vector_store %arg7[%c0_8, %c0_9], %9 {strides = array<i32>} : memref<32x256xf32, #tpu.memory_space<vmem>>, vector<32x256xf32>,
    %c0_i32_10 = arith.constant 0 : i32
    %11 = arith.cmpi eq, %arg3, %c0_i32_10 : i32
    %12 = arith.extui %11 : i1 to i32
    %c0_i32_11 = arith.constant 0 : i32
    %13 = arith.cmpi ne, %12, %c0_i32_11 : i32
    scf.if %13 {
      %c0_12 = arith.constant 0 : index
      %c0_13 = arith.constant 0 : index
      %14 = vector.load %arg7[%c0_12, %c0_13] : memref<32x256xf32, #tpu.memory_space<vmem>>, vector<32x256xf32>
      %15 = arith.truncf %14 : vector<32x256xf32> to vector<32x256xbf16>
      %c0_14 = arith.constant 0 : index
      %c0_15 = arith.constant 0 : index
      %c0_16 = arith.constant 0 : index
      %16 = vector.load %arg6[%c0_14, %c0_15, %c0_16] : memref<1x32x256xbf16, #tpu.memory_space<vmem>>, vector<1x32x256xbf16>
      %17 = vector.shape_cast %16 : vector<1x32x256xbf16> to vector<32x256xbf16>
      %18 = vector.shape_cast %15 : vector<32x256xbf16> to vector<1x32x256xbf16>
      tpu.vector_store %arg6[%c0_14, %c0_15, %c0_16], %18 {strides = array<i32>} : memref<1x32x256xbf16, #tpu.memory_space<vmem>>, vector<1x32x256xbf16>,
    } else {
    }
    return
  }
  func.func @transform_0(%arg0: i32, %arg1: i32, %arg2: i32, %arg3: i32) -> (i32, i32, i32) {
    %c0_i32 = arith.constant 0 : i32
    return %arg0, %arg1, %arg3 : i32, i32, i32
  }
  func.func @transform_1(%arg0: i32, %arg1: i32, %arg2: i32, %arg3: i32) -> (i32, i32, i32) {
    %c0_i32 = arith.constant 0 : i32
    return %arg0, %arg3, %arg2 : i32, i32, i32
  }
  func.func @transform_2(%arg0: i32, %arg1: i32, %arg2: i32, %arg3: i32) -> (i32, i32, i32) {
    %c0_i32 = arith.constant 0 : i32
    return %arg0, %arg1, %arg2 : i32, i32, i32
  }
}

</mosaic_0001>

<llo_original>
// kernel: tpu_custom_call.1
$region0: #{tpu_custom_call.1}
  #allocation0 [shape = 'u32[]', space=smem, size = 0x4, offset = 0x4, fixed_abs, tag = 'smem constant byte address 0x4 - core index']
  #allocation1 [shape = 'u32[144,128]{1,0:T(1,128)}', space=vmem, size = 0x12000, scoped, tag = 'internal scratch']
  #allocation2 [shape = 'f32[32,256]{1,0:T(8,128)}', space=vmem, size = 0x8000, scoped, tag = 'scratch operand']
  %s0 = inlined_call_operand.hbm [shape: bf16[1,32,256], index: 0, kind: input, shape index: {}]
  %s1 = inlined_call_operand.hbm [shape: bf16[1,256,768], index: 1, kind: input, shape index: {}]
  %s2 = inlined_call_operand.hbm [shape: bf16[1,32,768], index: 2, kind: output, shape index: {}]
  %s3 = sld [smem:[#allocation0]]
  $region57: #{tpu_custom_call.1} parent=0
    _
  %s5 = ssub.s32 1, %s3
  %s6 = scalar_select 0, %s5, %s3
  $region1: #{tpu_custom_call.1} parent=0
    #allocation3 [shape = 'u8[16384]{0}', space=vmem, size = 0x4000, scoped, tag = 'input window, operand 0, single buffered']
    #allocation4 [shape = 's32[2]{0}', space=sflag, size = 0x8, scoped, tag = 'scoped memory for tpu_custom_call.1']
    #allocation5 [shape = 's32[2]{0}', space=sflag, size = 0x8, scoped, tag = 'scoped memory for tpu_custom_call.1']
    #allocation6 [shape = 'u8[262144]{0}', space=vmem, size = 0x40000, scoped, tag = 'input window, operand 1']
    #allocation7 [shape = 's32[2]{0}', space=sflag, size = 0x8, scoped, tag = 'scoped memory for tpu_custom_call.1']
    #allocation8 [shape = 'u8[32768]{0}', space=vmem, size = 0x8000, scoped, tag = 'output window, operand 0']
    %7 = vsyncpa [#allocation4], 0
    %8 = vsyncpa [#allocation7], 0
    %s9 = scalar_lea.sflag [#allocation7], 1
    %10 = vsyncpa %s9, 0
    %11 = vsyncpa [#allocation5], 0
    %s12 = scalar_lea.sflag [#allocation5], 1
    %13 = vsyncpa %s12, 0
    loop: start=0, step=1, limit=5
    $region2: #{tpu_custom_call.1} parent=1 // loop_pre_header
      _
    $region3: #{tpu_custom_call.1} parent=1 // loop_header
      %s15 = sphi 0, %s19
      %p16 = scmp.ge.s32.totalorder %s15, 5
      %s22 = sphi 0, %s48
      %s23 = sphi 0, %s44
      %s24 = sphi 0, %s40
      %s25 = sphi 0, %s36
      %s26 = sphi 0, %s22
      %s27 = sphi 0, %s23
      %s28 = sphi 0, %s24
      %s29 = sphi 0, %s25
      %s30 = sphi 0, %s26
      %s31 = sphi 0, %s27
      %s32 = sphi 0, %s28
      %s33 = sphi 0, %s29
      %s55 = sphi 0, %s57
      %s58 = sphi 0, %s55
      %s59 = sphi 0, %s58
      %s75 = sphi 0, %s59
      %s85 = sphi 0, %s87
      %s88 = sphi 0, %s85
      %s89 = sphi 0, %s88
      %s105 = sphi 0, %s89
      %s115 = sphi 0, %s117
      %s118 = sphi 0, %s115
      %s119 = sphi 0, %s118
      %s135 = sphi 0, %s119
    $region4: #{tpu_custom_call.1} parent=1 // loop_header_branch
      %18 = sbr.rel (%p16) target = $region8
    $region5: #{tpu_custom_call.1} parent=1 // loop_body
      %s20 = ssub.s32 %s15, 1
      %s21 = ssub.s32 %s15, 2
      %s34 = sadd.s32 1, %s25
      %p35 = scmp.ge.s32.totalorder %s34, 1
      %s36 = scalar_select %p35, 0, %s34
      %s37 = sadd.s32 1, %s24
      %s38 = scalar_select %p35, %s37, %s24
      %p39 = scmp.ge.s32.totalorder %s38, 3
      %s40 = scalar_select %p39, 0, %s38
      %s41 = sadd.s32 1, %s23
      %s42 = scalar_select %p39, %s41, %s23
      %p43 = scmp.ge.s32.totalorder %s42, 1
      %s44 = scalar_select %p43, 0, %s42
      %s45 = sadd.s32 1, %s22
      %s46 = scalar_select %p43, %s45, %s22
      %p47 = scmp.ge.s32.totalorder %s46, 1
      %s48 = scalar_select %p47, 0, %s46
      %s49 = ssub.s32 %s22, %s48
      %s50 = ssub.s32 %s23, %s44
      %s51 = sor.u32 %s49, %s50
      %s52 = ssub.s32 %s25, %s36
      %s53 = sor.u32 %s51, %s52
      %p54 = scmp.eq.s32.totalorder %s53, 0
      %s56 = sadd.s32 %s55, 1
      %s57 = scalar_select %p54, %s55, %s56
      %p60 = pneg %p54
      %p61 = scmp.eq.s32.totalorder %s15, 2
      %p62 = por %p60, %p61
      %p63 = scmp.ne.s32.totalorder %s55, %s58
      %p64 = scmp.eq.s32.totalorder %s15, 0
      %p65 = por %p63, %p64
      %p66 = scmp.ne.s32.totalorder %s55, %s58
      %p67 = scmp.eq.s32.totalorder %s20, 2
      %p68 = por %p66, %p67
      %p69 = scmp.ne.s32.totalorder %s58, %s59
      %p70 = scmp.eq.s32.totalorder %s20, 0
      %p71 = por %p69, %p70
      %p72 = scmp.ne.s32.totalorder %s58, %s59
      %p73 = scmp.eq.s32.totalorder %s21, 2
      %p74 = por %p72, %p73
      %p76 = scmp.ne.s32.totalorder %s59, %s75
      %p77 = scmp.eq.s32.totalorder %s21, 0
      %p78 = por %p76, %p77
      %s79 = ssub.s32 %s22, %s48
      %s80 = ssub.s32 %s25, %s36
      %s81 = sor.u32 %s79, %s80
      %s82 = ssub.s32 %s24, %s40
      %s83 = sor.u32 %s81, %s82
      %p84 = scmp.eq.s32.totalorder %s83, 0
      %s86 = sadd.s32 %s85, 1
      %s87 = scalar_select %p84, %s85, %s86
      %p90 = pneg %p84
      %p91 = scmp.eq.s32.totalorder %s15, 2
      %p92 = por %p90, %p91
      %p93 = scmp.ne.s32.totalorder %s85, %s88
      %p94 = scmp.eq.s32.totalorder %s15, 0
      %p95 = por %p93, %p94
      %p96 = scmp.ne.s32.totalorder %s85, %s88
      %p97 = scmp.eq.s32.totalorder %s20, 2
      %p98 = por %p96, %p97
      %p99 = scmp.ne.s32.totalorder %s88, %s89
      %p100 = scmp.eq.s32.totalorder %s20, 0
      %p101 = por %p99, %p100
      %p102 = scmp.ne.s32.totalorder %s88, %s89
      %p103 = scmp.eq.s32.totalorder %s21, 2
      %p104 = por %p102, %p103
      %p106 = scmp.ne.s32.totalorder %s89, %s105
      %p107 = scmp.eq.s32.totalorder %s21, 0
      %p108 = por %p106, %p107
      %s109 = ssub.s32 %s22, %s48
      %s110 = ssub.s32 %s23, %s44
      %s111 = sor.u32 %s109, %s110
      %s112 = ssub.s32 %s24, %s40
      %s113 = sor.u32 %s111, %s112
      %p114 = scmp.eq.s32.totalorder %s113, 0
      %s116 = sadd.s32 %s115, 1
      %s117 = scalar_select %p114, %s115, %s116
      %p120 = pneg %p114
      %p121 = scmp.eq.s32.totalorder %s15, 2
      %p122 = por %p120, %p121
      %p123 = scmp.ne.s32.totalorder %s115, %s118
      %p124 = scmp.eq.s32.totalorder %s15, 0
      %p125 = por %p123, %p124
      %p126 = scmp.ne.s32.totalorder %s115, %s118
      %p127 = scmp.eq.s32.totalorder %s20, 2
      %p128 = por %p126, %p127
      %p129 = scmp.ne.s32.totalorder %s118, %s119
      %p130 = scmp.eq.s32.totalorder %s20, 0
      %p131 = por %p129, %p130
      %p132 = scmp.ne.s32.totalorder %s118, %s119
      %p133 = scmp.eq.s32.totalorder %s21, 2
      %p134 = por %p132, %p133
      %p136 = scmp.ne.s32.totalorder %s119, %s135
      %p137 = scmp.eq.s32.totalorder %s21, 0
      %p138 = por %p136, %p137
      %p139 = scmp.le.s32.totalorder 1, %s15
      %p140 = scmp.lt.s32.totalorder %s15, 4
      %p141 = pnand %p139, %p140
      %p142 = pneg %p141
      // Predicated region
      $region9: #{tpu_custom_call.1} parent=5 // pred_check
        _
      $region10: #{tpu_custom_call.1} parent=5 // pred_check_branch
        %144 = sbr.rel (%p141) target = $region12
      $region11: #{tpu_custom_call.1} parent=5 // pred_region
        %s145 = ssub.s32 %s15, 1
        // Predicated region
        $region13: #{tpu_custom_call.1} parent=11 // pred_check
          %p146 = pneg %p71
        $region14: #{tpu_custom_call.1} parent=11 // pred_check_branch
          %148 = sbr.rel (%p146) target = $region16
        $region15: #{tpu_custom_call.1} parent=11 // pred_region
          %s149 = smul.u32 4, %s27
          %s150 = smul.u32 2, %s29
          %s152 = ssub.s32 512, 512
          %153 = vsyncadd [#allocation4], %s152
          %s154 = smul.addr %s149, 2
          %s155 = sadd.s32 %s150, %s154
          %s156 = smul.addr %s26, 8
          %s157 = sadd.s32 %s155, %s156
          %s158 = smul.addr %s157, 64
          %s159 = scalar_lea.hbm %s0, %s158
          %s160 = sshll.u32 [#allocation3], 4
          %s161 = int_to_ptr.vmem [resolvable:$true] %s160
          %166 = dma.hbm_to_vmem [thread:$0]  %s159, 512, %s161, [#allocation4], 128, 128, 8
        $region16: #{tpu_custom_call.1} parent=11 // pred_fallthru
          _
      $region12: #{tpu_custom_call.1} parent=5 // pred_fallthru
        _
      %p167 = scmp.lt.s32.totalorder %s15, 3
      // Predicated region
      $region17: #{tpu_custom_call.1} parent=5 // pred_check
        %p168 = pneg %p167
      $region18: #{tpu_custom_call.1} parent=5 // pred_check_branch
        %170 = sbr.rel (%p168) target = $region20
      $region19: #{tpu_custom_call.1} parent=5 // pred_region
        // Predicated region
        $region21: #{tpu_custom_call.1} parent=19 // pred_check
          %p171 = pneg %p95
        $region22: #{tpu_custom_call.1} parent=19 // pred_check_branch
          %173 = sbr.rel (%p171) target = $region24
        $region23: #{tpu_custom_call.1} parent=19 // pred_region
          %s174 = sand.u32 %s85, 1
          %s175 = scalar_lea.sflag [#allocation7], %s174
          %s176 = sand.u32 %s85, 1
          %s177 = smul.addr %s176, 256
          %s178 = scalar_lea.vmem [#allocation6], %s177
          %s179 = smul.u32 32, %s25
          %s180 = smul.u32 2, %s24
          %s182 = ssub.s32 4096, 4096
          %183 = vsyncadd %s175, %s182
          %s184 = smul.addr %s179, 6
          %s185 = sadd.s32 %s180, %s184
          %s186 = smul.addr %s22, 192
          %s187 = sadd.s32 %s185, %s186
          %s188 = smul.addr %s187, 64
          %s189 = scalar_lea.hbm %s1, %s188
          %s190 = sshll.u32 %s178, 4
          %s191 = int_to_ptr.vmem [resolvable:$true] %s190
          %196 = dma.hbm_to_vmem [thread:$0]  %s189, 4096, %s191, %s175, 384, 128, 8
        $region24: #{tpu_custom_call.1} parent=19 // pred_fallthru
          _
      $region20: #{tpu_custom_call.1} parent=5 // pred_fallthru
        _
      %p197 = scmp.le.s32.totalorder 1, %s15
      %p198 = scmp.lt.s32.totalorder %s15, 4
      %p199 = pnand %p197, %p198
      %p200 = pneg %p199
      // Predicated region
      $region25: #{tpu_custom_call.1} parent=5 // pred_check
        _
      $region26: #{tpu_custom_call.1} parent=5 // pred_check_branch
        %202 = sbr.rel (%p199) target = $region28
      $region27: #{tpu_custom_call.1} parent=5 // pred_region
        %s203 = ssub.s32 %s15, 1
        // Predicated region
        $region29: #{tpu_custom_call.1} parent=27 // pred_check
          %p204 = pneg %p71
        $region30: #{tpu_custom_call.1} parent=27 // pred_check_branch
          %206 = sbr.rel (%p204) target = $region32
        $region31: #{tpu_custom_call.1} parent=27 // pred_region
          %207 = dma.done [#allocation4], 512
        $region32: #{tpu_custom_call.1} parent=27 // pred_fallthru
          _
        %s208 = sand.u32 %s88, 1
        %s209 = scalar_lea.sflag [#allocation7], %s208
        %s210 = sand.u32 %s88, 1
        %s211 = smul.addr %s210, 256
        %s212 = scalar_lea.vmem [#allocation6], %s211
        // Predicated region
        $region33: #{tpu_custom_call.1} parent=27 // pred_check
          %p213 = pneg %p101
        $region34: #{tpu_custom_call.1} parent=27 // pred_check_branch
          %215 = sbr.rel (%p213) target = $region36
        $region35: #{tpu_custom_call.1} parent=27 // pred_region
          %216 = dma.done %s209, 4096
        $region36: #{tpu_custom_call.1} parent=27 // pred_fallthru
          _
        %p217 = pneg %p71
        %p218 = pneg %p68
        %s219 = sand.u32 %s88, 1
        %s220 = scalar_lea.sflag [#allocation7], %s219
        %s221 = sand.u32 %s88, 1
        %s222 = smul.addr %s221, 256
        %s223 = scalar_lea.vmem [#allocation6], %s222
        %p224 = pneg %p101
        %p225 = pneg %p98
        %p226 = pneg %p131
        %p227 = pneg %p128
        %s228 = sand.u32 %s118, 1
        %s229 = scalar_lea.sflag [#allocation5], %s228
        %s230 = sand.u32 %s118, 1
        %s231 = smul.addr %s230, 32
        %s232 = scalar_lea.vmem [#allocation8], %s231
        %s233 = smul.u32 4, %s27
        %s234 = smul.u32 2, %s29
        %s235 = smul.u32 32, %s29
        %s236 = smul.u32 2, %s28
        %s237 = smul.u32 4, %s27
        %s238 = smul.u32 2, %s28
        %p239 = scmp.eq.s32.totalorder %s29, 0
        // Predicated region
        $region37: #{tpu_custom_call.1} parent=27 // pred_check
          %p240 = pneg %p239
        $region38: #{tpu_custom_call.1} parent=27 // pred_check_branch
          %242 = sbr.rel (%p240) target = $region40
        $region39: #{tpu_custom_call.1} parent=27 // pred_region
          %243 = vst [vmem:[#allocation2] sm:$0xff] 0.0
          %244 = vst [vmem:[#allocation2 + $0x8] sm:$0xff] 0.0
          %245 = vst [vmem:[#allocation2 + $0x10] sm:$0xff] 0.0
          %246 = vst [vmem:[#allocation2 + $0x18] sm:$0xff] 0.0
          %247 = vst [vmem:[#allocation2 + $0x20] sm:$0xff] 0.0
          %248 = vst [vmem:[#allocation2 + $0x28] sm:$0xff] 0.0
          %249 = vst [vmem:[#allocation2 + $0x30] sm:$0xff] 0.0
          %250 = vst [vmem:[#allocation2 + $0x38] sm:$0xff] 0.0
        $region40: #{tpu_custom_call.1} parent=27 // pred_fallthru
          _
        %v251 = vld [vmem:[#allocation2] sm:$0xff]
        %v252 = vld [vmem:[#allocation2 + $0x8] sm:$0xff]
        %v253 = vld [vmem:[#allocation2 + $0x10] sm:$0xff]
        %v254 = vld [vmem:[#allocation2 + $0x18] sm:$0xff]
        %v255 = vld [vmem:[#allocation2 + $0x20] sm:$0xff]
        %v256 = vld [vmem:[#allocation2 + $0x28] sm:$0xff]
        %v257 = vld [vmem:[#allocation2 + $0x30] sm:$0xff]
        %v258 = vld [vmem:[#allocation2 + $0x38] sm:$0xff]
        %v259 = vld [vmem:[#allocation3] sm:$0xff]
        %v260 = vld [vmem:[#allocation3 + $0x8] sm:$0xff]
        %v261 = vld [vmem:[#allocation3 + $0x10] sm:$0xff]
        %v262 = vld [vmem:[#allocation3 + $0x18] sm:$0xff]
        %v263 = vld [vmem:[%s212] sm:$0xff]
        %v264 = vld [vmem:[%s212 + $0x8] sm:$0xff]
        %v265 = vld [vmem:[%s212 + $0x10] sm:$0xff]
        %v266 = vld [vmem:[%s212 + $0x18] sm:$0xff]
        %v267 = vld [vmem:[%s212 + $0x20] sm:$0xff]
        %v268 = vld [vmem:[%s212 + $0x28] sm:$0xff]
        %v269 = vld [vmem:[%s212 + $0x30] sm:$0xff]
        %v270 = vld [vmem:[%s212 + $0x38] sm:$0xff]
        %v271 = vld [vmem:[%s212 + $0x40] sm:$0xff]
        %v272 = vld [vmem:[%s212 + $0x48] sm:$0xff]
        %v273 = vld [vmem:[%s212 + $0x50] sm:$0xff]
        %v274 = vld [vmem:[%s212 + $0x58] sm:$0xff]
        %v275 = vld [vmem:[%s212 + $0x60] sm:$0xff]
        %v276 = vld [vmem:[%s212 + $0x68] sm:$0xff]
        %v277 = vld [vmem:[%s212 + $0x70] sm:$0xff]
        %v278 = vld [vmem:[%s212 + $0x78] sm:$0xff]
        %v279 = vld [vmem:[%s212 + $0x80] sm:$0xff]
        %v280 = vld [vmem:[%s212 + $0x88] sm:$0xff]
        %v281 = vld [vmem:[%s212 + $0x90] sm:$0xff]
        %v282 = vld [vmem:[%s212 + $0x98] sm:$0xff]
        %v283 = vld [vmem:[%s212 + $0xa0] sm:$0xff]
        %v284 = vld [vmem:[%s212 + $0xa8] sm:$0xff]
        %v285 = vld [vmem:[%s212 + $0xb0] sm:$0xff]
        %v286 = vld [vmem:[%s212 + $0xb8] sm:$0xff]
        %v287 = vld [vmem:[%s212 + $0xc0] sm:$0xff]
        %v288 = vld [vmem:[%s212 + $0xc8] sm:$0xff]
        %v289 = vld [vmem:[%s212 + $0xd0] sm:$0xff]
        %v290 = vld [vmem:[%s212 + $0xd8] sm:$0xff]
        %v291 = vld [vmem:[%s212 + $0xe0] sm:$0xff]
        %v292 = vld [vmem:[%s212 + $0xe8] sm:$0xff]
        %v293 = vld [vmem:[%s212 + $0xf0] sm:$0xff]
        %v294 = vld [vmem:[%s212 + $0xf8] sm:$0xff]
        %v299 = vunpack.c.l.b16 %v259
        %v300 = vunpack.c.h.b16 %v259
        %v301 = vunpack.c.l.b16 %v260
        %v302 = vunpack.c.h.b16 %v260
        %v303 = vunpack.c.l.b16 %v261
        %v304 = vunpack.c.h.b16 %v261
        %v305 = vunpack.c.l.b16 %v262
        %v306 = vunpack.c.h.b16 %v262
        %v307 = vpack.c.b16 %v301, %v299
        %v308 = vpack.c.b16 %v302, %v300
        %v309 = vpack.c.b16 %v305, %v303
        %v310 = vpack.c.b16 %v306, %v304
        %v347 = vunpack.c.l.b16 %v263
        %v348 = vunpack.c.h.b16 %v263
        %v349 = vunpack.c.l.b16 %v264
        %v350 = vunpack.c.h.b16 %v264
        %v351 = vunpack.c.l.b16 %v265
        %v352 = vunpack.c.h.b16 %v265
        %v353 = vunpack.c.l.b16 %v266
        %v354 = vunpack.c.h.b16 %v266
        %v355 = vunpack.c.l.b16 %v267
        %v356 = vunpack.c.h.b16 %v267
        %v357 = vunpack.c.l.b16 %v268
        %v358 = vunpack.c.h.b16 %v268
        %v359 = vunpack.c.l.b16 %v269
        %v360 = vunpack.c.h.b16 %v269
        %v361 = vunpack.c.l.b16 %v270
        %v362 = vunpack.c.h.b16 %v270
        %v363 = vunpack.c.l.b16 %v271
        %v364 = vunpack.c.h.b16 %v271
        %v365 = vunpack.c.l.b16 %v272
        %v366 = vunpack.c.h.b16 %v272
        %v367 = vunpack.c.l.b16 %v273
        %v368 = vunpack.c.h.b16 %v273
        %v369 = vunpack.c.l.b16 %v274
        %v370 = vunpack.c.h.b16 %v274
        %v371 = vunpack.c.l.b16 %v275
        %v372 = vunpack.c.h.b16 %v275
        %v373 = vunpack.c.l.b16 %v276
        %v374 = vunpack.c.h.b16 %v276
        %v375 = vunpack.c.l.b16 %v277
        %v376 = vunpack.c.h.b16 %v277
        %v377 = vunpack.c.l.b16 %v278
        %v378 = vunpack.c.h.b16 %v278
        %v379 = vunpack.c.l.b16 %v279
        %v380 = vunpack.c.h.b16 %v279
        %v381 = vunpack.c.l.b16 %v280
        %v382 = vunpack.c.h.b16 %v280
        %v383 = vunpack.c.l.b16 %v281
        %v384 = vunpack.c.h.b16 %v281
        %v385 = vunpack.c.l.b16 %v282
        %v386 = vunpack.c.h.b16 %v282
        %v387 = vunpack.c.l.b16 %v283
        %v388 = vunpack.c.h.b16 %v283
        %v389 = vunpack.c.l.b16 %v284
        %v390 = vunpack.c.h.b16 %v284
        %v391 = vunpack.c.l.b16 %v285
        %v392 = vunpack.c.h.b16 %v285
        %v393 = vunpack.c.l.b16 %v286
        %v394 = vunpack.c.h.b16 %v286
        %v395 = vunpack.c.l.b16 %v287
        %v396 = vunpack.c.h.b16 %v287
        %v397 = vunpack.c.l.b16 %v288
        %v398 = vunpack.c.h.b16 %v288
        %v399 = vunpack.c.l.b16 %v289
        %v400 = vunpack.c.h.b16 %v289
        %v401 = vunpack.c.l.b16 %v290
        %v402 = vunpack.c.h.b16 %v290
        %v403 = vunpack.c.l.b16 %v291
        %v404 = vunpack.c.h.b16 %v291
        %v405 = vunpack.c.l.b16 %v292
        %v406 = vunpack.c.h.b16 %v292
        %v407 = vunpack.c.l.b16 %v293
        %v408 = vunpack.c.h.b16 %v293
        %v409 = vunpack.c.l.b16 %v294
        %v410 = vunpack.c.h.b16 %v294
        %v411 = vpack.c.b16 %v349, %v347
        %v412 = vpack.c.b16 %v350, %v348
        %v413 = vpack.c.b16 %v353, %v351
        %v414 = vpack.c.b16 %v354, %v352
        %v415 = vpack.c.b16 %v357, %v355
        %v416 = vpack.c.b16 %v358, %v356
        %v417 = vpack.c.b16 %v361, %v359
        %v418 = vpack.c.b16 %v362, %v360
        %v419 = vpack.c.b16 %v365, %v363
        %v420 = vpack.c.b16 %v366, %v364
        %v421 = vpack.c.b16 %v369, %v367
        %v422 = vpack.c.b16 %v370, %v368
        %v423 = vpack.c.b16 %v373, %v371
        %v424 = vpack.c.b16 %v374, %v372
        %v425 = vpack.c.b16 %v377, %v375
        %v426 = vpack.c.b16 %v378, %v376
        %v427 = vpack.c.b16 %v381, %v379
        %v428 = vpack.c.b16 %v382, %v380
        %v429 = vpack.c.b16 %v385, %v383
        %v430 = vpack.c.b16 %v386, %v384
        %v431 = vpack.c.b16 %v389, %v387
        %v432 = vpack.c.b16 %v390, %v388
        %v433 = vpack.c.b16 %v393, %v391
        %v434 = vpack.c.b16 %v394, %v392
        %v435 = vpack.c.b16 %v397, %v395
        %v436 = vpack.c.b16 %v398, %v396
        %v437 = vpack.c.b16 %v401, %v399
        %v438 = vpack.c.b16 %v402, %v400
        %v439 = vpack.c.b16 %v405, %v403
        %v440 = vpack.c.b16 %v406, %v404
        %v441 = vpack.c.b16 %v409, %v407
        %v442 = vpack.c.b16 %v410, %v408
        %475 = vmatprep.subr.bf16.mxu0 %v412
        %476 = vmatpush1.bf16.msra.mxu0 %v411
        %477 = vmatprep.subr.bf16.mxu0 %v414
        %478 = vmatpush1.bf16.msra.mxu0 %v413
        %479 = vmatprep.subr.bf16.mxu0 %v416
        %480 = vmatpush1.bf16.msra.mxu0 %v415
        %481 = vmatprep.subr.bf16.mxu0 %v418
        %482 = vmatpush1.bf16.msra.mxu0 %v417
        %483 = vmatprep.subr.bf16.mxu0 %v420
        %484 = vmatpush1.bf16.msra.mxu0 %v419
        %485 = vmatprep.subr.bf16.mxu0 %v422
        %486 = vmatpush1.bf16.msra.mxu0 %v421
        %487 = vmatprep.subr.bf16.mxu0 %v424
        %488 = vmatpush1.bf16.msra.mxu0 %v423
        %489 = vmatprep.subr.bf16.mxu0 %v426
        %490 = vmatpush1.bf16.msra.mxu0 %v425
        %491 = vmatprep.subr.bf16.mxu0 %v428
        %492 = vmatpush1.bf16.msra.mxu0 %v427
        %493 = vmatprep.subr.bf16.mxu0 %v430
        %494 = vmatpush1.bf16.msra.mxu0 %v429
        %495 = vmatprep.subr.bf16.mxu0 %v432
        %496 = vmatpush1.bf16.msra.mxu0 %v431
        %497 = vmatprep.subr.bf16.mxu0 %v434
        %498 = vmatpush1.bf16.msra.mxu0 %v433
        %499 = vmatprep.subr.bf16.mxu0 %v436
        %500 = vmatpush1.bf16.msra.mxu0 %v435
        %501 = vmatprep.subr.bf16.mxu0 %v438
        %502 = vmatpush1.bf16.msra.mxu0 %v437
        %503 = vmatprep.subr.bf16.mxu0 %v440
        %504 = vmatpush1.bf16.msra.mxu0 %v439
        %505 = vmatprep.subr.bf16.mxu0 %v442
        %506 = vmatpush1.bf16.msra.mxu0 %v441
        %507 = vmatprep.mubr.bf16.mxu0 %v308
        %508 = vmatmul.mubr.bf16.gmra.mrb[0].mxu0 %v307
        %v509 = vpop.f32.mrb[0].mxu0
        %v510 = vadd.f32 0.0, %v509
        %v511 = vpop.f32.mrb[0].mxu0
        %v512 = vadd.f32 0.0, %v511
        %v513 = vpop.f32.mrb[0].mxu0
        %v514 = vadd.f32 0.0, %v513
        %v515 = vpop.f32.mrb[0].mxu0
        %v516 = vadd.f32 0.0, %v515
        %517 = vmatprep.mubr.bf16.mxu0 %v310
        %518 = vmatmul.mubr.bf16.gmra.mrb[0].mxu0 %v309
        %v519 = vpop.f32.mrb[0].mxu0
        %v520 = vadd.f32 0.0, %v519
        %v521 = vpop.f32.mrb[0].mxu0
        %v522 = vadd.f32 0.0, %v521
        %v523 = vpop.f32.mrb[0].mxu0
        %v524 = vadd.f32 0.0, %v523
        %v525 = vpop.f32.mrb[0].mxu0
        %v526 = vadd.f32 0.0, %v525
        %527 = vdwg.mxu0
        %v528 = vadd.f32 %v251, %v510
        %v529 = vadd.f32 %v252, %v512
        %v530 = vadd.f32 %v253, %v514
        %v531 = vadd.f32 %v254, %v516
        %v532 = vadd.f32 %v255, %v520
        %v533 = vadd.f32 %v256, %v522
        %v534 = vadd.f32 %v257, %v524
        %v535 = vadd.f32 %v258, %v526
        %536 = vst [vmem:[#allocation2] sm:$0xff] %v528
        %537 = vst [vmem:[#allocation2 + $0x8] sm:$0xff] %v529
        %538 = vst [vmem:[#allocation2 + $0x10] sm:$0xff] %v530
        %539 = vst [vmem:[#allocation2 + $0x18] sm:$0xff] %v531
        %540 = vst [vmem:[#allocation2 + $0x20] sm:$0xff] %v532
        %541 = vst [vmem:[#allocation2 + $0x28] sm:$0xff] %v533
        %542 = vst [vmem:[#allocation2 + $0x30] sm:$0xff] %v534
        %543 = vst [vmem:[#allocation2 + $0x38] sm:$0xff] %v535
        // Predicated region
        $region41: #{tpu_custom_call.1} parent=27 // pred_check
          %p544 = pneg %p239
        $region42: #{tpu_custom_call.1} parent=27 // pred_check_branch
          %546 = sbr.rel (%p544) target = $region44
        $region43: #{tpu_custom_call.1} parent=27 // pred_region
          %v547 = vld [vmem:[#allocation2] sm:$0xff]
          %v548 = vld [vmem:[#allocation2 + $0x8] sm:$0xff]
          %v549 = vld [vmem:[#allocation2 + $0x10] sm:$0xff]
          %v550 = vld [vmem:[#allocation2 + $0x18] sm:$0xff]
          %v551 = vld [vmem:[#allocation2 + $0x20] sm:$0xff]
          %v552 = vld [vmem:[#allocation2 + $0x28] sm:$0xff]
          %v553 = vld [vmem:[#allocation2 + $0x30] sm:$0xff]
          %v554 = vld [vmem:[#allocation2 + $0x38] sm:$0xff]
          %v555 = vpack.c.bf16 %v549, %v547
          %v556 = vpack.c.bf16 %v550, %v548
          %v557 = vpack.c.bf16 %v553, %v551
          %v558 = vpack.c.bf16 %v554, %v552
          %v563 = vunpack.c.l.b16 %v555
          %v564 = vunpack.c.l.b16 %v556
          %v565 = vunpack.c.h.b16 %v555
          %v566 = vunpack.c.h.b16 %v556
          %v567 = vunpack.c.l.b16 %v557
          %v568 = vunpack.c.l.b16 %v558
          %v569 = vunpack.c.h.b16 %v557
          %v570 = vunpack.c.h.b16 %v558
          %v571 = vpack.c.b16 %v564, %v563
          %v572 = vpack.c.b16 %v566, %v565
          %v573 = vpack.c.b16 %v568, %v567
          %v574 = vpack.c.b16 %v570, %v569
          %579 = vst [vmem:[%s232] sm:$0xff] %v571
          %580 = vst [vmem:[%s232 + $0x8] sm:$0xff] %v572
          %581 = vst [vmem:[%s232 + $0x10] sm:$0xff] %v573
          %582 = vst [vmem:[%s232 + $0x18] sm:$0xff] %v574
        $region44: #{tpu_custom_call.1} parent=27 // pred_fallthru
          _
        %s583 = sand.u32 %s118, 1
        %s584 = scalar_lea.sflag [#allocation5], %s583
        %s585 = sand.u32 %s118, 1
        %s586 = smul.addr %s585, 32
        %s587 = scalar_lea.vmem [#allocation8], %s586
        // Predicated region
        $region45: #{tpu_custom_call.1} parent=27 // pred_check
          %p588 = pneg %p128
        $region46: #{tpu_custom_call.1} parent=27 // pred_check_branch
          %590 = sbr.rel (%p588) target = $region48
        $region47: #{tpu_custom_call.1} parent=27 // pred_region
          %s591 = smul.u32 4, %s27
          %s592 = smul.u32 2, %s28
          %s594 = ssub.s32 512, 512
          %595 = vsyncadd %s584, %s594
          %s596 = smul.addr %s591, 6
          %s597 = sadd.s32 %s592, %s596
          %s598 = smul.addr %s26, 24
          %s599 = sadd.s32 %s597, %s598
          %s600 = smul.addr %s599, 64
          %s601 = scalar_lea.hbm %s2, %s600
          %s602 = sshll.u32 %s587, 4
          %s603 = int_to_ptr.vmem [resolvable:$true] %s602
          %608 = dma.vmem_to_hbm [thread:$0]  %s603, 512, %s601, %s584, 128, 384, 8
        $region48: #{tpu_custom_call.1} parent=27 // pred_fallthru
          _
      $region28: #{tpu_custom_call.1} parent=5 // pred_fallthru
        _
      %p609 = scmp.le.s32.totalorder 2, %s15
      // Predicated region
      $region49: #{tpu_custom_call.1} parent=5 // pred_check
        %p610 = pneg %p609
      $region50: #{tpu_custom_call.1} parent=5 // pred_check_branch
        %612 = sbr.rel (%p610) target = $region52
      $region51: #{tpu_custom_call.1} parent=5 // pred_region
        %s613 = ssub.s32 %s15, 2
        // Predicated region
        $region53: #{tpu_custom_call.1} parent=51 // pred_check
          %p614 = pneg %p134
        $region54: #{tpu_custom_call.1} parent=51 // pred_check_branch
          %616 = sbr.rel (%p614) target = $region56
        $region55: #{tpu_custom_call.1} parent=51 // pred_region
          %s617 = sand.u32 %s119, 1
          %s618 = scalar_lea.sflag [#allocation5], %s617
          %s619 = sand.u32 %s119, 1
          %s620 = smul.addr %s619, 32
          %s621 = scalar_lea.vmem [#allocation8], %s620
          %622 = dma.done %s618, 512
        $region56: #{tpu_custom_call.1} parent=51 // pred_fallthru
          _
      $region52: #{tpu_custom_call.1} parent=5 // pred_fallthru
        _
    $region6: #{tpu_custom_call.1} parent=1 // loop_footer
      %s19 = sadd.s32 1, %s15
    $region7: #{tpu_custom_call.1} parent=1 // loop_footer_branch
      %14 = sbr.rel target = $region3
    $region8: #{tpu_custom_call.1} parent=1 // loop_exit
      _
    %623 = vsyncpa [#allocation4], 1
    %s624 = scalar_lea.sflag [#allocation4], 1
    %625 = vsyncpa %s624, 1
    %626 = vsyncpa [#allocation7], 1
    %s627 = scalar_lea.sflag [#allocation7], 1
    %628 = vsyncpa %s627, 1
    %629 = vsyncpa [#allocation5], 1
    %s630 = scalar_lea.sflag [#allocation5], 1
    %631 = vsyncpa %s630, 1

</llo_original>
